<compile_context>
chip_gen: v6e
topology: v6e:2x2x1
jax: 0.10.0
libtpu: 0.0.40
codegen_flags: <defaults>
</compile_context>

<pallas_src>
import functools

import jax
import jax.numpy as jnp
from jax.experimental import pallas as pl
from jax.experimental.pallas import tpu as pltpu

_LANE = 128


def _round_up(n, m):
    return ((n + m - 1) // m) * m


# ----------------------------------------------------------------------------
# Fused kernel: both encoders + both decoders in one body (4 packed matmuls).
#   xp  : (TILE_B, K_IN)   packed/padded inputs  [x1 | x2 | 0...]
#   out : (TILE_B, OUT_W)  packed outputs        [z1 | z2 | recon1 | recon2 | 0]
# ----------------------------------------------------------------------------
def _dgccae_fused_kernel(xp_ref, w1_ref, b1_ref, w2_ref, b2_ref,
                         wd1_ref, bd1_ref, wd2_ref, bd2_ref, out_ref):
    xp = xp_ref[...]
    # Encoder hidden layers for both views in one N=2*hidden matmul.
    h_enc = jnp.dot(xp, w1_ref[...], preferred_element_type=jnp.float32) + b1_ref[...]
    h_enc = jnp.maximum(h_enc, 0.0)
    # Encoder output layers (latent) padded into an OUT_W-wide lane-dense slab;
    # z occupies cols [0, 2*latent), the remaining cols are exactly zero.
    z = jnp.dot(h_enc, w2_ref[...], preferred_element_type=jnp.float32) + b2_ref[...]
    # Decoder hidden layers: K is the full OUT_W slab (zero rows are no-ops).
    h_dec = jnp.dot(z, wd1_ref[...], preferred_element_type=jnp.float32) + bd1_ref[...]
    h_dec = jnp.maximum(h_dec, 0.0)
    # Decoder output layers, written into cols [2*latent, 2*latent + d1 + d2).
    recon = jnp.dot(h_dec, wd2_ref[...], preferred_element_type=jnp.float32) + bd2_ref[...]
    # z-slab and recon-slab occupy disjoint columns -> single VPU add packs both.
    out_ref[...] = (z + recon).astype(out_ref.dtype)


# ----------------------------------------------------------------------------
# Parameter construction (deterministic, torch.nn.Linear-style init)
# ----------------------------------------------------------------------------
def _linear_params(key, fan_in, fan_out, dtype=jnp.float32):
    kw, kb = jax.random.split(key)
    bound = 1.0 / jnp.sqrt(jnp.asarray(fan_in, dtype))
    w = jax.random.uniform(kw, (fan_in, fan_out), dtype, -bound, bound)
    b = jax.random.uniform(kb, (1, fan_out), dtype, -bound, bound)
    return w, b


def init_dgccae_params(key, view_dims, hidden=128, latent_dims=2):
    """Encoders: d_i -> hidden -> latent.  Decoders: latent -> hidden -> d_i."""
    params = {"encoders": [], "decoders": []}
    for d in view_dims:
        key, k1, k2, k3, k4 = jax.random.split(key, 5)
        e_w1, e_b1 = _linear_params(k1, d, hidden)
        e_w2, e_b2 = _linear_params(k2, hidden, latent_dims)
        d_w1, d_b1 = _linear_params(k3, latent_dims, hidden)
        d_w2, d_b2 = _linear_params(k4, hidden, d)
        params["encoders"].append((e_w1, e_b1, e_w2, e_b2))
        params["decoders"].append((d_w1, d_b1, d_w2, d_b2))
    return params


def pack_dgccae_params(params, view_dims, hidden=128, latent=2,
                       dtype=jnp.float32):
    """Pack per-view weights block-diagonally into lane-dense fused operands."""
    n = len(view_dims)
    d_sum = sum(view_dims)
    k_in = _round_up(d_sum, _LANE)              # packed-input lane width
    h2 = n * hidden                             # packed hidden width (256)
    out_w = _round_up(n * latent + d_sum, _LANE)  # packed-output lane width

    w1p = jnp.zeros((k_in, h2), dtype)
    b1p = jnp.zeros((1, h2), dtype)
    w2p = jnp.zeros((h2, out_w), dtype)
    b2p = jnp.zeros((1, out_w), dtype)
    wd1p = jnp.zeros((out_w, h2), dtype)
    bd1p = jnp.zeros((1, h2), dtype)
    wd2p = jnp.zeros((h2, out_w), dtype)
    bd2p = jnp.zeros((1, out_w), dtype)

    in_off = 0
    rec_off = n * latent
    for i, d in enumerate(view_dims):
        e_w1, e_b1, e_w2, e_b2 = params["encoders"][i]
        d_w1, d_b1, d_w2, d_b2 = params["decoders"][i]
        h_off = i * hidden
        z_off = i * latent
        w1p = w1p.at[in_off:in_off + d, h_off:h_off + hidden].set(e_w1)
        b1p = b1p.at[:, h_off:h_off + hidden].set(e_b1)
        w2p = w2p.at[h_off:h_off + hidden, z_off:z_off + latent].set(e_w2)
        b2p = b2p.at[:, z_off:z_off + latent].set(e_b2)
        wd1p = wd1p.at[z_off:z_off + latent, h_off:h_off + hidden].set(d_w1)
        bd1p = bd1p.at[:, h_off:h_off + hidden].set(d_b1)
        wd2p = wd2p.at[h_off:h_off + hidden, rec_off:rec_off + d].set(d_w2)
        bd2p = bd2p.at[:, rec_off:rec_off + d].set(d_b2)
        in_off += d
        rec_off += d

    return {"w1": w1p, "b1": b1p, "w2": w2p, "b2": b2p,
            "wd1": wd1p, "bd1": bd1p, "wd2": wd2p, "bd2": bd2p}


# ----------------------------------------------------------------------------
# Fused forward: z = encode(*x); x_recon = decode(*z); return z + x_recon
# ----------------------------------------------------------------------------
@functools.partial(jax.jit, static_argnums=(1, 2))
def dgccae_forward(packed, view_dims, latent, *views):
    dtype = views[0].dtype
    b = views[0].shape[0]
    k_in = packed["w1"].shape[0]
    out_w = packed["w2"].shape[1]

    # Layout plumbing (wrapper-side): present a lane-dense packed input slab.
    xcat = jnp.concatenate(views, axis=1)
    d_sum = xcat.shape[1]

    # Batch tile: one grid step for tiny batches; 256-row tiles (f32) otherwise.
    # 256 rows keeps double-buffered activation tiles well under v7x's 64 MiB VMEM.
    tile_b = 256 if b >= 256 else _round_up(b, 8)
    b_pad = _round_up(b, tile_b)
    xp = jnp.pad(xcat, ((0, b_pad - b), (0, k_in - d_sum)))

    grid = (b_pad // tile_b,)

    def batch_map(i):
        return (i, 0)

    def resident_map(i):           # weights/biases stay VMEM-resident
        return (0, 0)

    w_names = ("w1", "b1", "w2", "b2", "wd1", "bd1", "wd2", "bd2")
    in_specs = [pl.BlockSpec((tile_b, k_in), batch_map)]
    in_specs += [pl.BlockSpec(packed[name].shape, resident_map)
                 for name in w_names]

    out = pl.pallas_call(
        _dgccae_fused_kernel,
        out_shape=jax.ShapeDtypeStruct((b_pad, out_w), dtype),
        grid=grid,
        in_specs=in_specs,
        out_specs=pl.BlockSpec((tile_b, out_w), batch_map),
        compiler_params=pltpu.CompilerParams(
            dimension_semantics=("parallel",)),
    )(xp, *[packed[name] for name in w_names])

    # Unpack the lane-dense output slab back into (z1, z2, recon1, recon2).
    zs, recons = [], []
    z_off = 0
    r_off = len(views) * latent
    for d in view_dims:
        zs.append(out[:b, z_off:z_off + latent])
        recons.append(out[:b, r_off:r_off + d])
        z_off += latent
        r_off += d
    return tuple(zs) + tuple(recons)


# Pure-JAX reference (unpacked params) for correctness checking.
def dgccae_forward_ref(params, *views):
    zs = []
    for i, x in enumerate(views):
        w1, b1, w2, b2 = params["encoders"][i]
        h = jnp.maximum(x @ w1 + b1, 0.0)
        zs.append(h @ w2 + b2)
    recons = []
    for i, z in enumerate(zs):
        w1, b1, w2, b2 = params["decoders"][i]
        h = jnp.maximum(z @ w1 + b1, 0.0)
        recons.append(h @ w2 + b2)
    return tuple(zs) + tuple(recons)


if __name__ == "__main__":
    key = jax.random.PRNGKey(0)
    k_params, k_x1, k_x2 = jax.random.split(key, 3)

    batch = 8
    view_dims = (16, 12)          # two views (loss_type='cca' => exactly 2)
    latent_dims = 2
    hidden = 128                  # default hidden_layer_sizes = [[128], [128]]

    params = init_dgccae_params(k_params, view_dims, hidden, latent_dims)
    packed = pack_dgccae_params(params, view_dims, hidden, latent_dims)

    x1 = jax.random.normal(k_x1, (batch, view_dims[0]), jnp.float32)
    x2 = jax.random.normal(k_x2, (batch, view_dims[1]), jnp.float32)

    outs = dgccae_forward(packed, view_dims, latent_dims, x1, x2)
    outs = jax.block_until_ready(outs)

    z1, z2, r1, r2 = outs
    assert z1.shape == (batch, latent_dims)
    assert z2.shape == (batch, latent_dims)
    assert r1.shape == (batch, view_dims[0])
    assert r2.shape == (batch, view_dims[1])

    # Verify fused/packed kernel against the plain-JAX reference.
    ref = dgccae_forward_ref(params, x1, x2)
    for got, want in zip(outs, ref):
        assert jnp.allclose(got, want, atol=1e-4, rtol=1e-4), "mismatch vs ref"

    print("KERNEL_OK")
</pallas_src>

<mosaic_0001>
module attributes {stable_mosaic.version = 11 : i64} {
  func.func @_dgccae_fused_kernel(%arg0: i32, %arg1: memref<8x128xf32, #tpu.memory_space<vmem>>, %arg2: memref<128x256xf32, #tpu.memory_space<vmem>>, %arg3: memref<1x256xf32, #tpu.memory_space<vmem>>, %arg4: memref<256x128xf32, #tpu.memory_space<vmem>>, %arg5: memref<1x128xf32, #tpu.memory_space<vmem>>, %arg6: memref<128x256xf32, #tpu.memory_space<vmem>>, %arg7: memref<1x256xf32, #tpu.memory_space<vmem>>, %arg8: memref<256x128xf32, #tpu.memory_space<vmem>>, %arg9: memref<1x128xf32, #tpu.memory_space<vmem>>, %arg10: memref<8x128xf32, #tpu.memory_space<vmem>>) attributes {dimension_semantics = [#tpu.dimension_semantics<parallel>], iteration_bounds = array<i64: 1>, scalar_prefetch = 0 : i64, scratch_operands = 0 : i64, tpu.core_type = #tpu.core_type<tc>, window_params = [{transform_indices = @transform_0, window_bounds = array<i64: 8, 128>}, {pipeline_mode = #tpu.pipeline_mode<synchronous>, transform_indices = @transform_1, window_bounds = array<i64: 128, 256>}, {pipeline_mode = #tpu.pipeline_mode<synchronous>, transform_indices = @transform_2, window_bounds = array<i64: 1, 256>}, {pipeline_mode = #tpu.pipeline_mode<synchronous>, transform_indices = @transform_3, window_bounds = array<i64: 256, 128>}, {pipeline_mode = #tpu.pipeline_mode<synchronous>, transform_indices = @transform_4, window_bounds = array<i64: 1, 128>}, {pipeline_mode = #tpu.pipeline_mode<synchronous>, transform_indices = @transform_5, window_bounds = array<i64: 128, 256>}, {pipeline_mode = #tpu.pipeline_mode<synchronous>, transform_indices = @transform_6, window_bounds = array<i64: 1, 256>}, {pipeline_mode = #tpu.pipeline_mode<synchronous>, transform_indices = @transform_7, window_bounds = array<i64: 256, 128>}, {pipeline_mode = #tpu.pipeline_mode<synchronous>, transform_indices = @transform_8, window_bounds = array<i64: 1, 128>}, {transform_indices = @transform_9, window_bounds = array<i64: 8, 128>}]} {
    %c0 = arith.constant 0 : index
    %c0_0 = arith.constant 0 : index
    %0 = vector.load %arg1[%c0, %c0_0] : memref<8x128xf32, #tpu.memory_space<vmem>>, vector<8x128xf32>
    %c0_1 = arith.constant 0 : index
    %c0_2 = arith.constant 0 : index
    %1 = vector.load %arg2[%c0_1, %c0_2] : memref<128x256xf32, #tpu.memory_space<vmem>>, vector<128x256xf32>
    %cst = arith.constant dense<0.000000e+00> : vector<8x256xf32>
    %2 = tpu.matmul %0, %1, %cst {dimension_numbers = #tpu.dot_dimension_numbers<[1], [0], [0], [1], [0, 0, 1, 1], [], []>} : vector<8x128xf32>, vector<128x256xf32>, vector<8x256xf32> -> vector<8x256xf32>
    %c0_3 = arith.constant 0 : index
    %c0_4 = arith.constant 0 : index
    %3 = vector.load %arg3[%c0_3, %c0_4] : memref<1x256xf32, #tpu.memory_space<vmem>>, vector<1x256xf32>
    %4 = vector.broadcast %3 : vector<1x256xf32> to vector<8x256xf32>
    %5 = arith.addf %2, %4 : vector<8x256xf32>
    %cst_5 = arith.constant 0.000000e+00 : f32
    %6 = vector.broadcast %cst_5 : f32 to vector<8x256xf32>
    %7 = arith.maximumf %5, %6 : vector<8x256xf32>
    %c0_6 = arith.constant 0 : index
    %c0_7 = arith.constant 0 : index
    %8 = vector.load %arg4[%c0_6, %c0_7] : memref<256x128xf32, #tpu.memory_space<vmem>>, vector<256x128xf32>
    %cst_8 = arith.constant dense<0.000000e+00> : vector<8x128xf32>
    %9 = tpu.matmul %7, %8, %cst_8 {dimension_numbers = #tpu.dot_dimension_numbers<[1], [0], [0], [1], [0, 0, 1, 1], [], []>} : vector<8x256xf32>, vector<256x128xf32>, vector<8x128xf32> -> vector<8x128xf32>
    %c0_9 = arith.constant 0 : index
    %c0_10 = arith.constant 0 : index
    %10 = vector.load %arg5[%c0_9, %c0_10] : memref<1x128xf32, #tpu.memory_space<vmem>>, vector<1x128xf32>
    %11 = vector.broadcast %10 : vector<1x128xf32> to vector<8x128xf32>
    %12 = arith.addf %9, %11 : vector<8x128xf32>
    %c0_11 = arith.constant 0 : index
    %c0_12 = arith.constant 0 : index
    %13 = vector.load %arg6[%c0_11, %c0_12] : memref<128x256xf32, #tpu.memory_space<vmem>>, vector<128x256xf32>
    %cst_13 = arith.constant dense<0.000000e+00> : vector<8x256xf32>
    %14 = tpu.matmul %12, %13, %cst_13 {dimension_numbers = #tpu.dot_dimension_numbers<[1], [0], [0], [1], [0, 0, 1, 1], [], []>} : vector<8x128xf32>, vector<128x256xf32>, vector<8x256xf32> -> vector<8x256xf32>
    %c0_14 = arith.constant 0 : index
    %c0_15 = arith.constant 0 : index
    %15 = vector.load %arg7[%c0_14, %c0_15] : memref<1x256xf32, #tpu.memory_space<vmem>>, vector<1x256xf32>
    %16 = vector.broadcast %15 : vector<1x256xf32> to vector<8x256xf32>
    %17 = arith.addf %14, %16 : vector<8x256xf32>
    %cst_16 = arith.constant 0.000000e+00 : f32
    %18 = vector.broadcast %cst_16 : f32 to vector<8x256xf32>
    %19 = arith.maximumf %17, %18 : vector<8x256xf32>
    %c0_17 = arith.constant 0 : index
    %c0_18 = arith.constant 0 : index
    %20 = vector.load %arg8[%c0_17, %c0_18] : memref<256x128xf32, #tpu.memory_space<vmem>>, vector<256x128xf32>
    %cst_19 = arith.constant dense<0.000000e+00> : vector<8x128xf32>
    %21 = tpu.matmul %19, %20, %cst_19 {dimension_numbers = #tpu.dot_dimension_numbers<[1], [0], [0], [1], [0, 0, 1, 1], [], []>} : vector<8x256xf32>, vector<256x128xf32>, vector<8x128xf32> -> vector<8x128xf32>
    %c0_20 = arith.constant 0 : index
    %c0_21 = arith.constant 0 : index
    %22 = vector.load %arg9[%c0_20, %c0_21] : memref<1x128xf32, #tpu.memory_space<vmem>>, vector<1x128xf32>
    %23 = vector.broadcast %22 : vector<1x128xf32> to vector<8x128xf32>
    %24 = arith.addf %21, %23 : vector<8x128xf32>
    %25 = arith.addf %12, %24 : vector<8x128xf32>
    %c0_22 = arith.constant 0 : index
    %c0_23 = arith.constant 0 : index
    %26 = vector.load %arg10[%c0_22, %c0_23] : memref<8x128xf32, #tpu.memory_space<vmem>>, vector<8x128xf32>
    tpu.vector_store %arg10[%c0_22, %c0_23], %25 {strides = array<i32>} : memref<8x128xf32, #tpu.memory_space<vmem>>, vector<8x128xf32>,
    return
  }
  func.func @transform_0(%arg0: i32) -> (i32, i32) {
    %c0_i32 = arith.constant 0 : i32
    %c0_i32_0 = arith.constant 0 : i32
    return %arg0, %c0_i32 : i32, i32
  }
  func.func @transform_1(%arg0: i32) -> (i32, i32) {
    %c0_i32 = arith.constant 0 : i32
    %c0_i32_0 = arith.constant 0 : i32
    %c0_i32_1 = arith.constant 0 : i32
    return %c0_i32, %c0_i32_0 : i32, i32
  }
  func.func @transform_2(%arg0: i32) -> (i32, i32) {
    %c0_i32 = arith.constant 0 : i32
    %c0_i32_0 = arith.constant 0 : i32
    %c0_i32_1 = arith.constant 0 : i32
    return %c0_i32, %c0_i32_0 : i32, i32
  }
  func.func @transform_3(%arg0: i32) -> (i32, i32) {
    %c0_i32 = arith.constant 0 : i32
    %c0_i32_0 = arith.constant 0 : i32
    %c0_i32_1 = arith.constant 0 : i32
    return %c0_i32, %c0_i32_0 : i32, i32
  }
  func.func @transform_4(%arg0: i32) -> (i32, i32) {
    %c0_i32 = arith.constant 0 : i32
    %c0_i32_0 = arith.constant 0 : i32
    %c0_i32_1 = arith.constant 0 : i32
    return %c0_i32, %c0_i32_0 : i32, i32
  }
  func.func @transform_5(%arg0: i32) -> (i32, i32) {
    %c0_i32 = arith.constant 0 : i32
    %c0_i32_0 = arith.constant 0 : i32
    %c0_i32_1 = arith.constant 0 : i32
    return %c0_i32, %c0_i32_0 : i32, i32
  }
  func.func @transform_6(%arg0: i32) -> (i32, i32) {
    %c0_i32 = arith.constant 0 : i32
    %c0_i32_0 = arith.constant 0 : i32
    %c0_i32_1 = arith.constant 0 : i32
    return %c0_i32, %c0_i32_0 : i32, i32
  }
  func.func @transform_7(%arg0: i32) -> (i32, i32) {
    %c0_i32 = arith.constant 0 : i32
    %c0_i32_0 = arith.constant 0 : i32
    %c0_i32_1 = arith.constant 0 : i32
    return %c0_i32, %c0_i32_0 : i32, i32
  }
  func.func @transform_8(%arg0: i32) -> (i32, i32) {
    %c0_i32 = arith.constant 0 : i32
    %c0_i32_0 = arith.constant 0 : i32
    %c0_i32_1 = arith.constant 0 : i32
    return %c0_i32, %c0_i32_0 : i32, i32
  }
  func.func @transform_9(%arg0: i32) -> (i32, i32) {
    %c0_i32 = arith.constant 0 : i32
    %c0_i32_0 = arith.constant 0 : i32
    return %arg0, %c0_i32 : i32, i32
  }
}

</mosaic_0001>

<llo_original>
// kernel: dgccae_forward.1
$region0: #{dgccae_forward.1}
  #allocation0 [shape = 'u32[]', space=smem, size = 0x4, offset = 0x4, fixed_abs, tag = 'smem constant byte address 0x4 - core index']
  #allocation1 [shape = 'u32[144,128]{1,0:T(1,128)}', space=vmem, size = 0x12000, scoped, tag = 'internal scratch']
  %s0 = inlined_call_operand.vmem [shape: f32[8,128], index: 0, kind: input, shape index: {}]
  %s1 = inlined_call_operand.hbm [shape: f32[128,256], index: 1, kind: input, shape index: {}]
  %s2 = inlined_call_operand.vmem [shape: f32[1,256], index: 2, kind: input, shape index: {}]
  %s3 = inlined_call_operand.hbm [shape: f32[256,128], index: 3, kind: input, shape index: {}]
  %s4 = inlined_call_operand.vmem [shape: f32[1,128], index: 4, kind: input, shape index: {}]
  %s5 = inlined_call_operand.hbm [shape: f32[128,256], index: 5, kind: input, shape index: {}]
  %s6 = inlined_call_operand.vmem [shape: f32[1,256], index: 6, kind: input, shape index: {}]
  %s7 = inlined_call_operand.hbm [shape: f32[256,128], index: 7, kind: input, shape index: {}]
  %s8 = inlined_call_operand.vmem [shape: f32[1,128], index: 8, kind: input, shape index: {}]
  %s9 = inlined_call_operand.vmem [shape: f32[8,128], index: 9, kind: output, shape index: {}]
  %s10 = sld [smem:[#allocation0]]
  $region62: #{dgccae_forward.1} parent=0
    _
  %s12 = ssub.s32 1, %s10
  %s13 = scalar_select 0, %s12, %s10
  $region1: #{dgccae_forward.1} parent=0
    #allocation2 [shape = 'u8[131072]{0}', space=vmem, size = 0x20000, scoped, tag = 'input window, operand 1, single buffered']
    #allocation3 [shape = 's32[1]{0}', space=sflag, size = 0x4, scoped, tag = 'scoped memory for dgccae_forward.1']
    #allocation4 [shape = 'u8[131072]{0}', space=vmem, size = 0x20000, scoped, tag = 'input window, operand 3, single buffered']
    #allocation5 [shape = 's32[1]{0}', space=sflag, size = 0x4, scoped, tag = 'scoped memory for dgccae_forward.1']
    #allocation6 [shape = 'u8[131072]{0}', space=vmem, size = 0x20000, scoped, tag = 'input window, operand 5, single buffered']
    #allocation7 [shape = 'u8[131072]{0}', space=vmem, size = 0x20000, scoped, tag = 'input window, operand 7, single buffered']
    #allocation8 [shape = 's32[1]{0}', space=sflag, size = 0x4, scoped, tag = 'scoped memory for dgccae_forward.1']
    %14 = vsyncpa [#allocation3], 0
    %15 = vsyncpa [#allocation5], 0
    %16 = vsyncpa [#allocation8], 0
    // Predicated region
    $region2: #{dgccae_forward.1} parent=1 // pred_check
      _
    $region3: #{dgccae_forward.1} parent=1 // pred_check_branch
      %18 = sbr.rel (0) target = $region5
    $region4: #{dgccae_forward.1} parent=1 // pred_region
      _
    $region5: #{dgccae_forward.1} parent=1 // pred_fallthru
      _
    // Predicated region
    $region6: #{dgccae_forward.1} parent=1 // pred_check
      _
    $region7: #{dgccae_forward.1} parent=1 // pred_check_branch
      %20 = sbr.rel (0) target = $region9
    $region8: #{dgccae_forward.1} parent=1 // pred_region
      %s22 = ssub.s32 4096, 4096
      %23 = vsyncadd [#allocation3], %s22
      %s24 = sshll.u32 [#allocation2], 4
      %s25 = int_to_ptr.vmem [resolvable:$true] %s24
      %30 = dma.hbm_to_vmem [thread:$0]  %s1, 4096, %s25, [#allocation3], 256, 256, 16
    $region9: #{dgccae_forward.1} parent=1 // pred_fallthru
      _
    // Predicated region
    $region10: #{dgccae_forward.1} parent=1 // pred_check
      _
    $region11: #{dgccae_forward.1} parent=1 // pred_check_branch
      %32 = sbr.rel (0) target = $region13
    $region12: #{dgccae_forward.1} parent=1 // pred_region
      _
    $region13: #{dgccae_forward.1} parent=1 // pred_fallthru
      _
    // Predicated region
    $region14: #{dgccae_forward.1} parent=1 // pred_check
      _
    $region15: #{dgccae_forward.1} parent=1 // pred_check_branch
      %34 = sbr.rel (0) target = $region17
    $region16: #{dgccae_forward.1} parent=1 // pred_region
      %s36 = ssub.s32 4096, 4096
      %37 = vsyncadd [#allocation5], %s36
      %s38 = sshll.u32 [#allocation4], 4
      %s39 = int_to_ptr.vmem [resolvable:$true] %s38
      %44 = dma.hbm_to_vmem [thread:$0]  %s3, 4096, %s39, [#allocation5], 128, 128, 8
    $region17: #{dgccae_forward.1} parent=1 // pred_fallthru
      _
    // Predicated region
    $region18: #{dgccae_forward.1} parent=1 // pred_check
      _
    $region19: #{dgccae_forward.1} parent=1 // pred_check_branch
      %46 = sbr.rel (0) target = $region21
    $region20: #{dgccae_forward.1} parent=1 // pred_region
      _
    $region21: #{dgccae_forward.1} parent=1 // pred_fallthru
      _
    // Predicated region
    $region22: #{dgccae_forward.1} parent=1 // pred_check
      _
    $region23: #{dgccae_forward.1} parent=1 // pred_check_branch
      %48 = sbr.rel (0) target = $region25
    $region24: #{dgccae_forward.1} parent=1 // pred_region
      %s50 = ssub.s32 4096, 4096
      %51 = vsyncadd [#allocation5], %s50
      %s52 = sshll.u32 [#allocation6], 4
      %s53 = int_to_ptr.vmem [resolvable:$true] %s52
      %58 = dma.hbm_to_vmem [thread:$0]  %s5, 4096, %s53, [#allocation5], 256, 256, 16
    $region25: #{dgccae_forward.1} parent=1 // pred_fallthru
      _
    // Predicated region
    $region26: #{dgccae_forward.1} parent=1 // pred_check
      _
    $region27: #{dgccae_forward.1} parent=1 // pred_check_branch
      %60 = sbr.rel (0) target = $region29
    $region28: #{dgccae_forward.1} parent=1 // pred_region
      _
    $region29: #{dgccae_forward.1} parent=1 // pred_fallthru
      _
    // Predicated region
    $region30: #{dgccae_forward.1} parent=1 // pred_check
      _
    $region31: #{dgccae_forward.1} parent=1 // pred_check_branch
      %62 = sbr.rel (0) target = $region33
    $region32: #{dgccae_forward.1} parent=1 // pred_region
      %s64 = ssub.s32 4096, 4096
      %65 = vsyncadd [#allocation8], %s64
      %s66 = sshll.u32 [#allocation7], 4
      %s67 = int_to_ptr.vmem [resolvable:$true] %s66
      %72 = dma.hbm_to_vmem [thread:$0]  %s7, 4096, %s67, [#allocation8], 128, 128, 8
    $region33: #{dgccae_forward.1} parent=1 // pred_fallthru
      _
    // Predicated region
    $region34: #{dgccae_forward.1} parent=1 // pred_check
      _
    $region35: #{dgccae_forward.1} parent=1 // pred_check_branch
      %74 = sbr.rel (0) target = $region37
    $region36: #{dgccae_forward.1} parent=1 // pred_region
      _
    $region37: #{dgccae_forward.1} parent=1 // pred_fallthru
      _
    // Predicated region
    $region38: #{dgccae_forward.1} parent=1 // pred_check
      _
    $region39: #{dgccae_forward.1} parent=1 // pred_check_branch
      %76 = sbr.rel (0) target = $region41
    $region40: #{dgccae_forward.1} parent=1 // pred_region
      %77 = dma.done [#allocation3], 4096
    $region41: #{dgccae_forward.1} parent=1 // pred_fallthru
      _
    // Predicated region
    $region42: #{dgccae_forward.1} parent=1 // pred_check
      _
    $region43: #{dgccae_forward.1} parent=1 // pred_check_branch
      %79 = sbr.rel (0) target = $region45
    $region44: #{dgccae_forward.1} parent=1 // pred_region
      %80 = dma.done [#allocation5], 4096
    $region45: #{dgccae_forward.1} parent=1 // pred_fallthru
      _
    // Predicated region
    $region46: #{dgccae_forward.1} parent=1 // pred_check
      _
    $region47: #{dgccae_forward.1} parent=1 // pred_check_branch
      %82 = sbr.rel (0) target = $region49
    $region48: #{dgccae_forward.1} parent=1 // pred_region
      %83 = dma.done [#allocation5], 4096
    $region49: #{dgccae_forward.1} parent=1 // pred_fallthru
      _
    // Predicated region
    $region50: #{dgccae_forward.1} parent=1 // pred_check
      _
    $region51: #{dgccae_forward.1} parent=1 // pred_check_branch
      %85 = sbr.rel (0) target = $region53
    $region52: #{dgccae_forward.1} parent=1 // pred_region
      %86 = dma.done [#allocation8], 4096
    $region53: #{dgccae_forward.1} parent=1 // pred_fallthru
      _
    %v87 = vld [vmem:[%s0] sm:$0xff]
    %v88 = vld [vmem:[#allocation2] sm:$0xff]
    %v89 = vld [vmem:[#allocation2 + $0x8] sm:$0xff]
    %v90 = vld [vmem:[#allocation2 + $0x10] sm:$0xff]
    %v91 = vld [vmem:[#allocation2 + $0x18] sm:$0xff]
    %v92 = vld [vmem:[#allocation2 + $0x20] sm:$0xff]
    %v93 = vld [vmem:[#allocation2 + $0x28] sm:$0xff]
    %v94 = vld [vmem:[#allocation2 + $0x30] sm:$0xff]
    %v95 = vld [vmem:[#allocation2 + $0x38] sm:$0xff]
    %v96 = vld [vmem:[#allocation2 + $0x40] sm:$0xff]
    %v97 = vld [vmem:[#allocation2 + $0x48] sm:$0xff]
    %v98 = vld [vmem:[#allocation2 + $0x50] sm:$0xff]
    %v99 = vld [vmem:[#allocation2 + $0x58] sm:$0xff]
    %v100 = vld [vmem:[#allocation2 + $0x60] sm:$0xff]
    %v101 = vld [vmem:[#allocation2 + $0x68] sm:$0xff]
    %v102 = vld [vmem:[#allocation2 + $0x70] sm:$0xff]
    %v103 = vld [vmem:[#allocation2 + $0x78] sm:$0xff]
    %v104 = vld [vmem:[#allocation2 + $0x80] sm:$0xff]
    %v105 = vld [vmem:[#allocation2 + $0x88] sm:$0xff]
    %v106 = vld [vmem:[#allocation2 + $0x90] sm:$0xff]
    %v107 = vld [vmem:[#allocation2 + $0x98] sm:$0xff]
    %v108 = vld [vmem:[#allocation2 + $0xa0] sm:$0xff]
    %v109 = vld [vmem:[#allocation2 + $0xa8] sm:$0xff]
    %v110 = vld [vmem:[#allocation2 + $0xb0] sm:$0xff]
    %v111 = vld [vmem:[#allocation2 + $0xb8] sm:$0xff]
    %v112 = vld [vmem:[#allocation2 + $0xc0] sm:$0xff]
    %v113 = vld [vmem:[#allocation2 + $0xc8] sm:$0xff]
    %v114 = vld [vmem:[#allocation2 + $0xd0] sm:$0xff]
    %v115 = vld [vmem:[#allocation2 + $0xd8] sm:$0xff]
    %v116 = vld [vmem:[#allocation2 + $0xe0] sm:$0xff]
    %v117 = vld [vmem:[#allocation2 + $0xe8] sm:$0xff]
    %v118 = vld [vmem:[#allocation2 + $0xf0] sm:$0xff]
    %v119 = vld [vmem:[#allocation2 + $0xf8] sm:$0xff]
    %v120 = vld [vmem:[%s2] sm:$0x3]
    %v122 = vlaneseq
    %v123 = vshrl.u32 %v122, 7
    %v124 = vsub.s32 0, %v123
    %v125 = vrot.slane %v120, %v124
    %v126 = vlaneseq
    %v127 = vshrl.u32 %v126, 7
    %v128 = vsub.s32 1, %v127
    %v129 = vrot.slane %v120, %v128
    %132 = vmatprep.subr.mxu0 %v119
    %133 = vmatpush1.msra.mxu0 %v118
    %134 = vmatprep.subr.mxu0 %v117
    %135 = vmatpush1.msra.mxu0 %v116
    %136 = vmatprep.subr.mxu0 %v115
    %137 = vmatpush1.msra.mxu0 %v114
    %138 = vmatprep.subr.mxu0 %v113
    %139 = vmatpush1.msra.mxu0 %v112
    %140 = vmatprep.subr.mxu0 %v111
    %141 = vmatpush1.msra.mxu0 %v110
    %142 = vmatprep.subr.mxu0 %v109
    %143 = vmatpush1.msra.mxu0 %v108
    %144 = vmatprep.subr.mxu0 %v107
    %145 = vmatpush1.msra.mxu0 %v106
    %146 = vmatprep.subr.mxu0 %v105
    %147 = vmatpush1.msra.mxu0 %v104
    %148 = vmatprep.subr.mxu0 %v103
    %149 = vmatpush1.msra.mxu0 %v102
    %150 = vmatprep.subr.mxu0 %v101
    %151 = vmatpush1.msra.mxu0 %v100
    %152 = vmatprep.subr.mxu0 %v99
    %153 = vmatpush1.msra.mxu0 %v98
    %154 = vmatprep.subr.mxu0 %v97
    %155 = vmatpush1.msra.mxu0 %v96
    %156 = vmatprep.subr.mxu0 %v95
    %157 = vmatpush1.msra.mxu0 %v94
    %158 = vmatprep.subr.mxu0 %v93
    %159 = vmatpush1.msra.mxu0 %v92
    %160 = vmatprep.subr.mxu0 %v91
    %161 = vmatpush1.msra.mxu0 %v90
    %162 = vmatprep.subr.mxu0 %v89
    %163 = vmatpush1.msra.mxu0 %v88
    %164 = vmatprep.subr.mxu0 0.0
    %165 = vmatpush2.msra.mxu0 0.0
    %166 = vmatprep.subr.mxu0 0.0
    %167 = vmatpush2.msra.mxu0 0.0
    %168 = vmatprep.subr.mxu0 0.0
    %169 = vmatpush2.msra.mxu0 0.0
    %170 = vmatprep.subr.mxu0 0.0
    %171 = vmatpush2.msra.mxu0 0.0
    %172 = vmatprep.subr.mxu0 0.0
    %173 = vmatpush2.msra.mxu0 0.0
    %174 = vmatprep.subr.mxu0 0.0
    %175 = vmatpush2.msra.mxu0 0.0
    %176 = vmatprep.subr.mxu0 0.0
    %177 = vmatpush2.msra.mxu0 0.0
    %178 = vmatprep.subr.mxu0 0.0
    %179 = vmatpush2.msra.mxu0 0.0
    %180 = vmatprep.subr.mxu0 0.0
    %181 = vmatpush2.msra.mxu0 0.0
    %182 = vmatprep.subr.mxu0 0.0
    %183 = vmatpush2.msra.mxu0 0.0
    %184 = vmatprep.subr.mxu0 0.0
    %185 = vmatpush2.msra.mxu0 0.0
    %186 = vmatprep.subr.mxu0 0.0
    %187 = vmatpush2.msra.mxu0 0.0
    %188 = vmatprep.subr.mxu0 0.0
    %189 = vmatpush2.msra.mxu0 0.0
    %190 = vmatprep.subr.mxu0 0.0
    %191 = vmatpush2.msra.mxu0 0.0
    %192 = vmatprep.subr.mxu0 0.0
    %193 = vmatpush2.msra.mxu0 0.0
    %194 = vmatprep.subr.mxu0 0.0
    %195 = vmatpush2.msra.mxu0 0.0
    %196 = vmatprep.mubr.f32.mxu0 0.0
    %197 = vmatmul.mubr.f32.gmra.mxu0 %v87
    %v198 = vpop.f32.mrf.mxu0
    %v199 = vadd.f32 %v125, %v198
    %v200 = vpop.f32.mrf.mxu0
    %v201 = vadd.f32 %v129, %v200
    %202 = vdwg.mxu0
    %v203 = vmax.f32 %v199, 0.0
    %v204 = vmax.f32 %v201, 0.0
    %v205 = vld [vmem:[#allocation4] sm:$0xff]
    %v206 = vld [vmem:[#allocation4 + $0x8] sm:$0xff]
    %v207 = vld [vmem:[#allocation4 + $0x10] sm:$0xff]
    %v208 = vld [vmem:[#allocation4 + $0x18] sm:$0xff]
    %v209 = vld [vmem:[#allocation4 + $0x20] sm:$0xff]
    %v210 = vld [vmem:[#allocation4 + $0x28] sm:$0xff]
    %v211 = vld [vmem:[#allocation4 + $0x30] sm:$0xff]
    %v212 = vld [vmem:[#allocation4 + $0x38] sm:$0xff]
    %v213 = vld [vmem:[#allocation4 + $0x40] sm:$0xff]
    %v214 = vld [vmem:[#allocation4 + $0x48] sm:$0xff]
    %v215 = vld [vmem:[#allocation4 + $0x50] sm:$0xff]
    %v216 = vld [vmem:[#allocation4 + $0x58] sm:$0xff]
    %v217 = vld [vmem:[#allocation4 + $0x60] sm:$0xff]
    %v218 = vld [vmem:[#allocation4 + $0x68] sm:$0xff]
    %v219 = vld [vmem:[#allocation4 + $0x70] sm:$0xff]
    %v220 = vld [vmem:[#allocation4 + $0x78] sm:$0xff]
    %v221 = vld [vmem:[#allocation4 + $0x80] sm:$0xff]
    %v222 = vld [vmem:[#allocation4 + $0x88] sm:$0xff]
    %v223 = vld [vmem:[#allocation4 + $0x90] sm:$0xff]
    %v224 = vld [vmem:[#allocation4 + $0x98] sm:$0xff]
    %v225 = vld [vmem:[#allocation4 + $0xa0] sm:$0xff]
    %v226 = vld [vmem:[#allocation4 + $0xa8] sm:$0xff]
    %v227 = vld [vmem:[#allocation4 + $0xb0] sm:$0xff]
    %v228 = vld [vmem:[#allocation4 + $0xb8] sm:$0xff]
    %v229 = vld [vmem:[#allocation4 + $0xc0] sm:$0xff]
    %v230 = vld [vmem:[#allocation4 + $0xc8] sm:$0xff]
    %v231 = vld [vmem:[#allocation4 + $0xd0] sm:$0xff]
    %v232 = vld [vmem:[#allocation4 + $0xd8] sm:$0xff]
    %v233 = vld [vmem:[#allocation4 + $0xe0] sm:$0xff]
    %v234 = vld [vmem:[#allocation4 + $0xe8] sm:$0xff]
    %v235 = vld [vmem:[#allocation4 + $0xf0] sm:$0xff]
    %v236 = vld [vmem:[#allocation4 + $0xf8] sm:$0xff]
    %v237 = vld [vmem:[%s4] sm:$0x1]
    %v239 = vlaneseq
    %v240 = vshrl.u32 %v239, 7
    %v241 = vsub.s32 0, %v240
    %v242 = vrot.slane %v237, %v241
    %244 = vmatprep.subr.mxu0 0.0
    %245 = vmatpush1.msra.mxu0 %v220
    %246 = vmatprep.subr.mxu0 0.0
    %247 = vmatpush1.msra.mxu0 %v219
    %248 = vmatprep.subr.mxu0 0.0
    %249 = vmatpush1.msra.mxu0 %v218
    %250 = vmatprep.subr.mxu0 0.0
    %251 = vmatpush1.msra.mxu0 %v217
    %252 = vmatprep.subr.mxu0 0.0
    %253 = vmatpush1.msra.mxu0 %v216
    %254 = vmatprep.subr.mxu0 0.0
    %255 = vmatpush1.msra.mxu0 %v215
    %256 = vmatprep.subr.mxu0 0.0
    %257 = vmatpush1.msra.mxu0 %v214
    %258 = vmatprep.subr.mxu0 0.0
    %259 = vmatpush1.msra.mxu0 %v213
    %260 = vmatprep.subr.mxu0 0.0
    %261 = vmatpush1.msra.mxu0 %v212
    %262 = vmatprep.subr.mxu0 0.0
    %263 = vmatpush1.msra.mxu0 %v211
    %264 = vmatprep.subr.mxu0 0.0
    %265 = vmatpush1.msra.mxu0 %v210
    %266 = vmatprep.subr.mxu0 0.0
    %267 = vmatpush1.msra.mxu0 %v209
    %268 = vmatprep.subr.mxu0 0.0
    %269 = vmatpush1.msra.mxu0 %v208
    %270 = vmatprep.subr.mxu0 0.0
    %271 = vmatpush1.msra.mxu0 %v207
    %272 = vmatprep.subr.mxu0 0.0
    %273 = vmatpush1.msra.mxu0 %v206
    %274 = vmatprep.subr.mxu0 0.0
    %275 = vmatpush1.msra.mxu0 %v205
    %276 = vmatprep.subr.mxu0 0.0
    %277 = vmatpush2.msra.mxu0 %v236
    %278 = vmatprep.subr.mxu0 0.0
    %279 = vmatpush2.msra.mxu0 %v235
    %280 = vmatprep.subr.mxu0 0.0
    %281 = vmatpush2.msra.mxu0 %v234
    %282 = vmatprep.subr.mxu0 0.0
    %283 = vmatpush2.msra.mxu0 %v233
    %284 = vmatprep.subr.mxu0 0.0
    %285 = vmatpush2.msra.mxu0 %v232
    %286 = vmatprep.subr.mxu0 0.0
    %287 = vmatpush2.msra.mxu0 %v231
    %288 = vmatprep.subr.mxu0 0.0
    %289 = vmatpush2.msra.mxu0 %v230
    %290 = vmatprep.subr.mxu0 0.0
    %291 = vmatpush2.msra.mxu0 %v229
    %292 = vmatprep.subr.mxu0 0.0
    %293 = vmatpush2.msra.mxu0 %v228
    %294 = vmatprep.subr.mxu0 0.0
    %295 = vmatpush2.msra.mxu0 %v227
    %296 = vmatprep.subr.mxu0 0.0
    %297 = vmatpush2.msra.mxu0 %v226
    %298 = vmatprep.subr.mxu0 0.0
    %299 = vmatpush2.msra.mxu0 %v225
    %300 = vmatprep.subr.mxu0 0.0
    %301 = vmatpush2.msra.mxu0 %v224
    %302 = vmatprep.subr.mxu0 0.0
    %303 = vmatpush2.msra.mxu0 %v223
    %304 = vmatprep.subr.mxu0 0.0
    %305 = vmatpush2.msra.mxu0 %v222
    %306 = vmatprep.subr.mxu0 0.0
    %307 = vmatpush2.msra.mxu0 %v221
    %308 = vmatprep.mubr.f32.mxu0 %v204
    %309 = vmatmul.mubr.f32.gmra.mxu0 %v203
    %v310 = vpop.f32.mrf.mxu0
    %v311 = vadd.f32 %v242, %v310
    %v312 = vpop.f32.mrf.mxu0
    %313 = vdwg.mxu0
    %v314 = vld [vmem:[#allocation6] sm:$0xff]
    %v315 = vld [vmem:[#allocation6 + $0x8] sm:$0xff]
    %v316 = vld [vmem:[#allocation6 + $0x10] sm:$0xff]
    %v317 = vld [vmem:[#allocation6 + $0x18] sm:$0xff]
    %v318 = vld [vmem:[#allocation6 + $0x20] sm:$0xff]
    %v319 = vld [vmem:[#allocation6 + $0x28] sm:$0xff]
    %v320 = vld [vmem:[#allocation6 + $0x30] sm:$0xff]
    %v321 = vld [vmem:[#allocation6 + $0x38] sm:$0xff]
    %v322 = vld [vmem:[#allocation6 + $0x40] sm:$0xff]
    %v323 = vld [vmem:[#allocation6 + $0x48] sm:$0xff]
    %v324 = vld [vmem:[#allocation6 + $0x50] sm:$0xff]
    %v325 = vld [vmem:[#allocation6 + $0x58] sm:$0xff]
    %v326 = vld [vmem:[#allocation6 + $0x60] sm:$0xff]
    %v327 = vld [vmem:[#allocation6 + $0x68] sm:$0xff]
    %v328 = vld [vmem:[#allocation6 + $0x70] sm:$0xff]
    %v329 = vld [vmem:[#allocation6 + $0x78] sm:$0xff]
    %v330 = vld [vmem:[#allocation6 + $0x80] sm:$0xff]
    %v331 = vld [vmem:[#allocation6 + $0x88] sm:$0xff]
    %v332 = vld [vmem:[#allocation6 + $0x90] sm:$0xff]
    %v333 = vld [vmem:[#allocation6 + $0x98] sm:$0xff]
    %v334 = vld [vmem:[#allocation6 + $0xa0] sm:$0xff]
    %v335 = vld [vmem:[#allocation6 + $0xa8] sm:$0xff]
    %v336 = vld [vmem:[#allocation6 + $0xb0] sm:$0xff]
    %v337 = vld [vmem:[#allocation6 + $0xb8] sm:$0xff]
    %v338 = vld [vmem:[#allocation6 + $0xc0] sm:$0xff]
    %v339 = vld [vmem:[#allocation6 + $0xc8] sm:$0xff]
    %v340 = vld [vmem:[#allocation6 + $0xd0] sm:$0xff]
    %v341 = vld [vmem:[#allocation6 + $0xd8] sm:$0xff]
    %v342 = vld [vmem:[#allocation6 + $0xe0] sm:$0xff]
    %v343 = vld [vmem:[#allocation6 + $0xe8] sm:$0xff]
    %v344 = vld [vmem:[#allocation6 + $0xf0] sm:$0xff]
    %v345 = vld [vmem:[#allocation6 + $0xf8] sm:$0xff]
    %v346 = vld [vmem:[%s6] sm:$0x3]
    %v348 = vlaneseq
    %v349 = vshrl.u32 %v348, 7
    %v350 = vsub.s32 0, %v349
    %v351 = vrot.slane %v346, %v350
    %v352 = vlaneseq
    %v353 = vshrl.u32 %v352, 7
    %v354 = vsub.s32 1, %v353
    %v355 = vrot.slane %v346, %v354
    %358 = vmatprep.subr.mxu0 %v345
    %359 = vmatpush1.msra.mxu0 %v344
    %360 = vmatprep.subr.mxu0 %v343
    %361 = vmatpush1.msra.mxu0 %v342
    %362 = vmatprep.subr.mxu0 %v341
    %363 = vmatpush1.msra.mxu0 %v340
    %364 = vmatprep.subr.mxu0 %v339
    %365 = vmatpush1.msra.mxu0 %v338
    %366 = vmatprep.subr.mxu0 %v337
    %367 = vmatpush1.msra.mxu0 %v336
    %368 = vmatprep.subr.mxu0 %v335
    %369 = vmatpush1.msra.mxu0 %v334
    %370 = vmatprep.subr.mxu0 %v333
    %371 = vmatpush1.msra.mxu0 %v332
    %372 = vmatprep.subr.mxu0 %v331
    %373 = vmatpush1.msra.mxu0 %v330
    %374 = vmatprep.subr.mxu0 %v329
    %375 = vmatpush1.msra.mxu0 %v328
    %376 = vmatprep.subr.mxu0 %v327
    %377 = vmatpush1.msra.mxu0 %v326
    %378 = vmatprep.subr.mxu0 %v325
    %379 = vmatpush1.msra.mxu0 %v324
    %380 = vmatprep.subr.mxu0 %v323
    %381 = vmatpush1.msra.mxu0 %v322
    %382 = vmatprep.subr.mxu0 %v321
    %383 = vmatpush1.msra.mxu0 %v320
    %384 = vmatprep.subr.mxu0 %v319
    %385 = vmatpush1.msra.mxu0 %v318
    %386 = vmatprep.subr.mxu0 %v317
    %387 = vmatpush1.msra.mxu0 %v316
    %388 = vmatprep.subr.mxu0 %v315
    %389 = vmatpush1.msra.mxu0 %v314
    %390 = vmatprep.subr.mxu0 0.0
    %391 = vmatpush2.msra.mxu0 0.0
    %392 = vmatprep.subr.mxu0 0.0
    %393 = vmatpush2.msra.mxu0 0.0
    %394 = vmatprep.subr.mxu0 0.0
    %395 = vmatpush2.msra.mxu0 0.0
    %396 = vmatprep.subr.mxu0 0.0
    %397 = vmatpush2.msra.mxu0 0.0
    %398 = vmatprep.subr.mxu0 0.0
    %399 = vmatpush2.msra.mxu0 0.0
    %400 = vmatprep.subr.mxu0 0.0
    %401 = vmatpush2.msra.mxu0 0.0
    %402 = vmatprep.subr.mxu0 0.0
    %403 = vmatpush2.msra.mxu0 0.0
    %404 = vmatprep.subr.mxu0 0.0
    %405 = vmatpush2.msra.mxu0 0.0
    %406 = vmatprep.subr.mxu0 0.0
    %407 = vmatpush2.msra.mxu0 0.0
    %408 = vmatprep.subr.mxu0 0.0
    %409 = vmatpush2.msra.mxu0 0.0
    %410 = vmatprep.subr.mxu0 0.0
    %411 = vmatpush2.msra.mxu0 0.0
    %412 = vmatprep.subr.mxu0 0.0
    %413 = vmatpush2.msra.mxu0 0.0
    %414 = vmatprep.subr.mxu0 0.0
    %415 = vmatpush2.msra.mxu0 0.0
    %416 = vmatprep.subr.mxu0 0.0
    %417 = vmatpush2.msra.mxu0 0.0
    %418 = vmatprep.subr.mxu0 0.0
    %419 = vmatpush2.msra.mxu0 0.0
    %420 = vmatprep.subr.mxu0 0.0
    %421 = vmatpush2.msra.mxu0 0.0
    %422 = vmatprep.mubr.f32.mxu0 0.0
    %423 = vmatmul.mubr.f32.gmra.mxu0 %v311
    %v424 = vpop.f32.mrf.mxu0
    %v425 = vadd.f32 %v351, %v424
    %v426 = vpop.f32.mrf.mxu0
    %v427 = vadd.f32 %v355, %v426
    %428 = vdwg.mxu0
    %v429 = vmax.f32 %v425, 0.0
    %v430 = vmax.f32 %v427, 0.0
    %v431 = vld [vmem:[#allocation7] sm:$0xff]
    %v432 = vld [vmem:[#allocation7 + $0x8] sm:$0xff]
    %v433 = vld [vmem:[#allocation7 + $0x10] sm:$0xff]
    %v434 = vld [vmem:[#allocation7 + $0x18] sm:$0xff]
    %v435 = vld [vmem:[#allocation7 + $0x20] sm:$0xff]
    %v436 = vld [vmem:[#allocation7 + $0x28] sm:$0xff]
    %v437 = vld [vmem:[#allocation7 + $0x30] sm:$0xff]
    %v438 = vld [vmem:[#allocation7 + $0x38] sm:$0xff]
    %v439 = vld [vmem:[#allocation7 + $0x40] sm:$0xff]
    %v440 = vld [vmem:[#allocation7 + $0x48] sm:$0xff]
    %v441 = vld [vmem:[#allocation7 + $0x50] sm:$0xff]
    %v442 = vld [vmem:[#allocation7 + $0x58] sm:$0xff]
    %v443 = vld [vmem:[#allocation7 + $0x60] sm:$0xff]
    %v444 = vld [vmem:[#allocation7 + $0x68] sm:$0xff]
    %v445 = vld [vmem:[#allocation7 + $0x70] sm:$0xff]
    %v446 = vld [vmem:[#allocation7 + $0x78] sm:$0xff]
    %v447 = vld [vmem:[#allocation7 + $0x80] sm:$0xff]
    %v448 = vld [vmem:[#allocation7 + $0x88] sm:$0xff]
    %v449 = vld [vmem:[#allocation7 + $0x90] sm:$0xff]
    %v450 = vld [vmem:[#allocation7 + $0x98] sm:$0xff]
    %v451 = vld [vmem:[#allocation7 + $0xa0] sm:$0xff]
    %v452 = vld [vmem:[#allocation7 + $0xa8] sm:$0xff]
    %v453 = vld [vmem:[#allocation7 + $0xb0] sm:$0xff]
    %v454 = vld [vmem:[#allocation7 + $0xb8] sm:$0xff]
    %v455 = vld [vmem:[#allocation7 + $0xc0] sm:$0xff]
    %v456 = vld [vmem:[#allocation7 + $0xc8] sm:$0xff]
    %v457 = vld [vmem:[#allocation7 + $0xd0] sm:$0xff]
    %v458 = vld [vmem:[#allocation7 + $0xd8] sm:$0xff]
    %v459 = vld [vmem:[#allocation7 + $0xe0] sm:$0xff]
    %v460 = vld [vmem:[#allocation7 + $0xe8] sm:$0xff]
    %v461 = vld [vmem:[#allocation7 + $0xf0] sm:$0xff]
    %v462 = vld [vmem:[#allocation7 + $0xf8] sm:$0xff]
    %v463 = vld [vmem:[%s8] sm:$0x1]
    %v465 = vlaneseq
    %v466 = vshrl.u32 %v465, 7
    %v467 = vsub.s32 0, %v466
    %v468 = vrot.slane %v463, %v467
    %470 = vmatprep.subr.mxu0 0.0
    %471 = vmatpush1.msra.mxu0 %v446
    %472 = vmatprep.subr.mxu0 0.0
    %473 = vmatpush1.msra.mxu0 %v445
    %474 = vmatprep.subr.mxu0 0.0
    %475 = vmatpush1.msra.mxu0 %v444
    %476 = vmatprep.subr.mxu0 0.0
    %477 = vmatpush1.msra.mxu0 %v443
    %478 = vmatprep.subr.mxu0 0.0
    %479 = vmatpush1.msra.mxu0 %v442
    %480 = vmatprep.subr.mxu0 0.0
    %481 = vmatpush1.msra.mxu0 %v441
    %482 = vmatprep.subr.mxu0 0.0
    %483 = vmatpush1.msra.mxu0 %v440
    %484 = vmatprep.subr.mxu0 0.0
    %485 = vmatpush1.msra.mxu0 %v439
    %486 = vmatprep.subr.mxu0 0.0
    %487 = vmatpush1.msra.mxu0 %v438
    %488 = vmatprep.subr.mxu0 0.0
    %489 = vmatpush1.msra.mxu0 %v437
    %490 = vmatprep.subr.mxu0 0.0
    %491 = vmatpush1.msra.mxu0 %v436
    %492 = vmatprep.subr.mxu0 0.0
    %493 = vmatpush1.msra.mxu0 %v435
    %494 = vmatprep.subr.mxu0 0.0
    %495 = vmatpush1.msra.mxu0 %v434
    %496 = vmatprep.subr.mxu0 0.0
    %497 = vmatpush1.msra.mxu0 %v433
    %498 = vmatprep.subr.mxu0 0.0
    %499 = vmatpush1.msra.mxu0 %v432
    %500 = vmatprep.subr.mxu0 0.0
    %501 = vmatpush1.msra.mxu0 %v431
    %502 = vmatprep.subr.mxu0 0.0
    %503 = vmatpush2.msra.mxu0 %v462
    %504 = vmatprep.subr.mxu0 0.0
    %505 = vmatpush2.msra.mxu0 %v461
    %506 = vmatprep.subr.mxu0 0.0
    %507 = vmatpush2.msra.mxu0 %v460
    %508 = vmatprep.subr.mxu0 0.0
    %509 = vmatpush2.msra.mxu0 %v459
    %510 = vmatprep.subr.mxu0 0.0
    %511 = vmatpush2.msra.mxu0 %v458
    %512 = vmatprep.subr.mxu0 0.0
    %513 = vmatpush2.msra.mxu0 %v457
    %514 = vmatprep.subr.mxu0 0.0
    %515 = vmatpush2.msra.mxu0 %v456
    %516 = vmatprep.subr.mxu0 0.0
    %517 = vmatpush2.msra.mxu0 %v455
    %518 = vmatprep.subr.mxu0 0.0
    %519 = vmatpush2.msra.mxu0 %v454
    %520 = vmatprep.subr.mxu0 0.0
    %521 = vmatpush2.msra.mxu0 %v453
    %522 = vmatprep.subr.mxu0 0.0
    %523 = vmatpush2.msra.mxu0 %v452
    %524 = vmatprep.subr.mxu0 0.0
    %525 = vmatpush2.msra.mxu0 %v451
    %526 = vmatprep.subr.mxu0 0.0
    %527 = vmatpush2.msra.mxu0 %v450
    %528 = vmatprep.subr.mxu0 0.0
    %529 = vmatpush2.msra.mxu0 %v449
    %530 = vmatprep.subr.mxu0 0.0
    %531 = vmatpush2.msra.mxu0 %v448
    %532 = vmatprep.subr.mxu0 0.0
    %533 = vmatpush2.msra.mxu0 %v447
    %534 = vmatprep.mubr.f32.mxu0 %v430
    %535 = vmatmul.mubr.f32.gmra.mxu0 %v429
    %v536 = vpop.f32.mrf.mxu0
    %v537 = vadd.f32 %v468, %v536
    %v538 = vpop.f32.mrf.mxu0
    %539 = vdwg.mxu0
    %v540 = vadd.f32 %v311, %v537
    %541 = vst [vmem:[%s9] sm:$0xff] %v540
    // Predicated region
    $region54: #{dgccae_forward.1} parent=1 // pred_check
      _
    $region55: #{dgccae_forward.1} parent=1 // pred_check_branch
      %543 = sbr.rel (0) target = $region57
    $region56: #{dgccae_forward.1} parent=1 // pred_region
      _
    $region57: #{dgccae_forward.1} parent=1 // pred_fallthru
      _
    // Predicated region
    $region58: #{dgccae_forward.1} parent=1 // pred_check
      _
    $region59: #{dgccae_forward.1} parent=1 // pred_check_branch
      %545 = sbr.rel (0) target = $region61
    $region60: #{dgccae_forward.1} parent=1 // pred_region
      _
    $region61: #{dgccae_forward.1} parent=1 // pred_fallthru
      _
    %546 = vsyncpa [#allocation3], 1
    %547 = vsyncpa [#allocation5], 1
    %548 = vsyncpa [#allocation8], 1

</llo_original>
